<compile_context>
chip_gen: v7x
topology: tpu7x:2x2x1
jax: 0.10.0
libtpu: 0.0.40
codegen_flags: <defaults>
</compile_context>

<pallas_src>
import jax
import jax.numpy as jnp
from jax.experimental import pallas as pl
from jax.experimental.pallas import tpu as pltpu

_TARGET_BLOCK_BYTES = 4 * 1024 * 1024   # ~4 MiB blocks (in+out double-buffered = 16 MiB VMEM)
_MIN_SPLIT_BYTES = 1 * 1024 * 1024      # arrays above this are split into >= _MIN_BLOCKS blocks
_MIN_BLOCKS = 4                         # >= 2 blocks per TensorCore on v7x
_VMEM_LIMIT_BYTES = 32 * 1024 * 1024    # explicit scoped-VMEM limit, safe on v5e/v6e/v7x


def _mish_kernel(x_ref, o_ref):
    x = x_ref[...]
    # bf16/f16: compute natively (v6e/v7x have bf16 VPU+EUP) so per-byte VALU/EUP
    # cost does not double; everything else computes in f32.
    if jnp.issubdtype(x.dtype, jnp.floating) and jnp.dtype(x.dtype).itemsize < 4:
        cx = x
    else:
        cx = x.astype(jnp.float32)
    # tanh(softplus(x)) as a rational function of u = exp(-|x|):
    #   e^{2*softplus(x)} = (1 + e^x)^2  =>  tanh(sp) = (2e^x + e^{2x}) / (2 + 2e^x + e^{2x})
    #   x >= 0 (u = e^{-x}):  (1 + 2u) / (1 + 2u + 2u^2)
    #   x <  0 (u = e^{x}):   (u^2 + 2u) / (u^2 + 2u + 2)
    # u is always in [0, 1] -> no overflow; a single EUP transcendental (exp).
    u = jnp.exp(-jnp.abs(cx))
    u2 = u * u
    two_u = 2.0 * u
    pos = cx >= 0.0
    num = jnp.where(pos, 1.0 + two_u, u2 + two_u)
    den = num + jnp.where(pos, 2.0 * u2, 2.0)
    # TODO(synk): num * pl.reciprocal(den, approx=True) would shave the divide's
    # Newton refinement for bf16 outputs, but pl.reciprocal only lowers for f32.
    o_ref[...] = (cx * (num / den)).astype(o_ref.dtype)


def _row_granule(itemsize):
    # Sub-32-bit dtypes pack along sublanes: 8 rows/vreg f32, 16 bf16/f16, 32 int8.
    return 8 * max(1, 4 // itemsize)


def _choose_tiling(n, itemsize):
    """Pick (lanes, rows, tile_rows) for a flat array of n elements, or None if ragged."""
    for lanes in (1024, 512, 256, 128):
        if n % lanes == 0:
            break
    else:
        return None  # not divisible by 128 -> caller uses the (rare) pad path
    rows = n // lanes
    granule = _row_granule(itemsize)
    target_rows = max(granule, _TARGET_BLOCK_BYTES // (lanes * itemsize))
    # Force >= _MIN_BLOCKS grid steps for anything over ~1 MiB so the pipeline
    # overlaps DMA/compute and both v7x TensorCores stream.
    if n * itemsize > _MIN_SPLIT_BYTES:
        cap = pl.cdiv(rows, _MIN_BLOCKS)
        cap = max(granule, (cap // granule) * granule)
        target_rows = min(target_rows, cap)
    if rows <= target_rows:
        tile_rows = rows                                      # full-extent block (ok even if < granule)
    else:
        tile_rows = max(granule, (target_rows // granule) * granule)
    return lanes, rows, tile_rows


def _mish_2d(x2d, tile_rows):
    rows, lanes = x2d.shape
    n = rows * lanes
    itemsize = x2d.dtype.itemsize
    return pl.pallas_call(
        _mish_kernel,
        out_shape=jax.ShapeDtypeStruct((rows, lanes), x2d.dtype),
        grid_spec=pltpu.PrefetchScalarGridSpec(
            num_scalar_prefetch=0,
            grid=(pl.cdiv(rows, tile_rows),),
            in_specs=[pl.BlockSpec((tile_rows, lanes), lambda i: (i, 0))],
            out_specs=pl.BlockSpec((tile_rows, lanes), lambda i: (i, 0)),
        ),
        compiler_params=pltpu.CompilerParams(
            dimension_semantics=("parallel",),
            vmem_limit_bytes=_VMEM_LIMIT_BYTES,
        ),
        cost_estimate=pl.CostEstimate(
            flops=10 * n,
            transcendentals=n,                 # one exp per element
            bytes_accessed=2 * n * itemsize,
        ),
    )(x2d)


def mish(x):
    """Elementwise Mish. Accepts any shape; computed in a tiled Pallas kernel."""
    orig_shape = x.shape
    n = x.size
    if n == 0:
        return x
    x_flat = x.reshape(-1)
    itemsize = jnp.dtype(x.dtype).itemsize

    tiling = _choose_tiling(n, itemsize)
    if tiling is not None:
        # Fast path: no pad, no output slice -> exactly one HBM read + one write.
        lanes, rows, tile_rows = tiling
        out2d = _mish_2d(x_flat.reshape(rows, lanes), tile_rows)
        return out2d.reshape(orig_shape)

    # Ragged fallback: pad to a dtype-aware (granule x 128) multiple; Mish(0)=0 so padding is inert.
    block = _row_granule(itemsize) * 128
    n_pad = ((n + block - 1) // block) * block
    x_pad = jnp.pad(x_flat, (0, n_pad - n))
    lanes, rows, tile_rows = _choose_tiling(n_pad, itemsize)
    out2d = _mish_2d(x_pad.reshape(rows, lanes), tile_rows)
    return out2d.reshape(-1)[:n].reshape(orig_shape)


def _mish_ref(x):
    xf = x.astype(jnp.float32)
    sp = jnp.maximum(xf, 0.0) + jnp.log1p(jnp.exp(-jnp.abs(xf)))
    return (xf * jnp.tanh(sp)).astype(x.dtype)


if __name__ == "__main__":
    key = jax.random.PRNGKey(0)
    k1, k2, k3, k4 = jax.random.split(key, 4)

    # Primary case: small NCHW f32 input (fast path, single full-extent block).
    x = jax.random.normal(k1, (2, 4, 16, 16), dtype=jnp.float32)
    out = jax.block_until_ready(mish(x))
    assert out.shape == x.shape and out.dtype == x.dtype
    assert jnp.allclose(out, _mish_ref(x), atol=1e-5, rtol=1e-5)

    # Medium f32 tensor (2 MiB): exercises the >= 4-block pipelined / megacore path.
    xm = jax.random.normal(k2, (8, 16, 64, 64), dtype=jnp.float32)
    out_m = jax.block_until_ready(mish(xm))
    assert out_m.shape == xm.shape
    assert jnp.allclose(out_m, _mish_ref(xm), atol=1e-5, rtol=1e-5)

    # Ragged case: exercises the pad fallback path.
    y = jax.random.normal(k3, (3, 5, 7, 11), dtype=jnp.float32)
    out_y = jax.block_until_ready(mish(y))
    assert out_y.shape == y.shape and out_y.dtype == y.dtype
    assert jnp.allclose(out_y, _mish_ref(y), atol=1e-5, rtol=1e-5)

    # bf16 case: exercises the native (no f32 upcast) compute path.
    z = jax.random.normal(k4, (2, 4, 16, 16), dtype=jnp.bfloat16)
    out_z = jax.block_until_ready(mish(z))
    assert out_z.shape == z.shape and out_z.dtype == z.dtype
    assert jnp.allclose(out_z.astype(jnp.float32), _mish_ref(z).astype(jnp.float32),
                        atol=5e-2, rtol=5e-2)

    print("KERNEL_OK")
</pallas_src>

<mosaic_0001>
module attributes {stable_mosaic.version = 11 : i64} {
  func.func @_mish_kernel(%arg0: i32, %arg1: memref<2x1024xf32, #tpu.memory_space<vmem>>, %arg2: memref<2x1024xf32, #tpu.memory_space<vmem>>) attributes {dimension_semantics = [#tpu.dimension_semantics<parallel>], iteration_bounds = array<i64: 1>, scalar_prefetch = 0 : i64, scratch_operands = 0 : i64, tpu.core_type = #tpu.core_type<tc>, window_params = [{transform_indices = @transform_0, window_bounds = array<i64: 2, 1024>}, {transform_indices = @transform_1, window_bounds = array<i64: 2, 1024>}]} {
    %c0 = arith.constant 0 : index
    %c0_0 = arith.constant 0 : index
    %0 = vector.load %arg1[%c0, %c0_0] : memref<2x1024xf32, #tpu.memory_space<vmem>>, vector<2x1024xf32>
    %1 = math.absf %0 : vector<2x1024xf32>
    %cst = arith.constant 0.000000e+00 : f32
    %2 = vector.broadcast %cst : f32 to vector<2x1024xf32>
    %3 = arith.subf %2, %1 : vector<2x1024xf32>
    %4 = math.exp %3 : vector<2x1024xf32>
    %5 = arith.mulf %4, %4 : vector<2x1024xf32>
    %cst_1 = arith.constant 2.000000e+00 : f32
    %6 = vector.broadcast %cst_1 : f32 to vector<2x1024xf32>
    %7 = arith.mulf %6, %4 : vector<2x1024xf32>
    %cst_2 = arith.constant 0.000000e+00 : f32
    %8 = vector.broadcast %cst_2 : f32 to vector<2x1024xf32>
    %9 = arith.cmpf oge, %0, %8 : vector<2x1024xf32>
    %cst_3 = arith.constant 1.000000e+00 : f32
    %10 = vector.broadcast %cst_3 : f32 to vector<2x1024xf32>
    %11 = arith.addf %10, %7 : vector<2x1024xf32>
    %12 = arith.addf %5, %7 : vector<2x1024xf32>
    %13 = arith.select %9, %11, %12 : vector<2x1024xi1>, vector<2x1024xf32>
    %cst_4 = arith.constant 2.000000e+00 : f32
    %14 = vector.broadcast %cst_4 : f32 to vector<2x1024xf32>
    %15 = arith.mulf %14, %5 : vector<2x1024xf32>
    %cst_5 = arith.constant 2.000000e+00 : f32
    %16 = vector.broadcast %cst_5 : f32 to vector<2x1024xf32>
    %17 = arith.select %9, %15, %16 : vector<2x1024xi1>, vector<2x1024xf32>
    %18 = arith.addf %13, %17 : vector<2x1024xf32>
    %19 = arith.divf %13, %18 : vector<2x1024xf32>
    %20 = arith.mulf %0, %19 : vector<2x1024xf32>
    %c0_6 = arith.constant 0 : index
    %c0_7 = arith.constant 0 : index
    %21 = vector.load %arg2[%c0_6, %c0_7] : memref<2x1024xf32, #tpu.memory_space<vmem>>, vector<2x1024xf32>
    tpu.vector_store %arg2[%c0_6, %c0_7], %20 {strides = array<i32>} : memref<2x1024xf32, #tpu.memory_space<vmem>>, vector<2x1024xf32>,
    return
  }
  func.func @transform_0(%arg0: i32) -> (i32, i32) {
    %c0_i32 = arith.constant 0 : i32
    %c0_i32_0 = arith.constant 0 : i32
    return %arg0, %c0_i32 : i32, i32
  }
  func.func @transform_1(%arg0: i32) -> (i32, i32) {
    %c0_i32 = arith.constant 0 : i32
    %c0_i32_0 = arith.constant 0 : i32
    return %arg0, %c0_i32 : i32, i32
  }
}

</mosaic_0001>

<llo_original>
// kernel: tpu_custom_call.1
$region0: #{tpu_custom_call.1}
  #allocation0 [shape = 'u32[]', space=smem, size = 0x4, offset = 0x4, fixed_abs, tag = 'smem constant byte address 0x4 - core index']
  #allocation1 [shape = 'u32[144,128]{1,0:T(1,128)}', space=vmem, size = 0x12000, scoped, tag = 'internal scratch']
  %s0 = inlined_call_operand.hbm [shape: f32[2,1024], index: 0, kind: input, shape index: {}]
  %s1 = inlined_call_operand.hbm [shape: f32[2,1024], index: 1, kind: output, shape index: {}]
  %s2 = sld [smem:[#allocation0]]
  $region18: #{tpu_custom_call.1} parent=0
    _
  %s4 = ssub.s32 1, %s2
  %s5 = scalar_select 0, %s4, %s2
  $region1: #{tpu_custom_call.1} parent=0
    #allocation2 [shape = 'u8[8192]{0}', space=vmem, size = 0x2000, scoped, tag = 'input window, operand 0, single buffered']
    #allocation3 [shape = 's32[1]{0}', space=sflag, size = 0x4, scoped, tag = 'scoped memory for tpu_custom_call.1']
    #allocation4 [shape = 's32[1]{0}', space=sflag, size = 0x4, scoped, tag = 'scoped memory for tpu_custom_call.1']
    #allocation5 [shape = 'u8[8192]{0}', space=vmem, size = 0x2000, scoped, tag = 'output window, operand 0, single buffered']
    %6 = vsyncpa [#allocation3], 0
    %7 = vsyncpa [#allocation4], 0
    // Predicated region
    $region2: #{tpu_custom_call.1} parent=1 // pred_check
      _
    $region3: #{tpu_custom_call.1} parent=1 // pred_check_branch
      %9 = sbr.rel (0) target = $region5
    $region4: #{tpu_custom_call.1} parent=1 // pred_region
      %s11 = ssub.s32 256, 256
      %12 = vsyncadd [#allocation3], %s11
      %s14 = sshll.u32 [#allocation2], 4
      %s15 = int_to_ptr.vmem [resolvable:$true] %s14
      %17 = dma.hbm_to_vmem [thread:$0]  %s0, 256, %s15, [#allocation3]
    $region5: #{tpu_custom_call.1} parent=1 // pred_fallthru
      _
    // Predicated region
    $region6: #{tpu_custom_call.1} parent=1 // pred_check
      _
    $region7: #{tpu_custom_call.1} parent=1 // pred_check_branch
      %19 = sbr.rel (0) target = $region9
    $region8: #{tpu_custom_call.1} parent=1 // pred_region
      %20 = dma.done [#allocation3], 256
    $region9: #{tpu_custom_call.1} parent=1 // pred_fallthru
      _
    %v21 = vld [vmem:[#allocation2] sm:$0xff]
    %v22 = vld [vmem:[#allocation2 + $0x8] sm:$0xff]
    %v23 = vand.u32 2147483647, %v21
    %v24 = vand.u32 2147483647, %v22
    %v25 = vsub.f32 0.0, %v23
    %v26 = vsub.f32 0.0, %v24
    %v27 = vmul.f32 %v25, 1.442695
    %v28 = vpow.pop %v27
    %v29 = vmul.f32 %v26, 1.442695
    %v30 = vpow.pop %v29
    %v31 = vmul.f32 %v28, %v28
    %v32 = vmul.f32 %v30, %v30
    %v33 = vmul.f32 %v28, 2.0
    %v34 = vmul.f32 %v30, 2.0
    %vm35 = vcmp.ge.f32.partialorder %v21, 0.0
    %vm36 = vcmp.ge.f32.partialorder %v22, 0.0
    %v37 = vadd.f32 %v33, 1.0
    %v38 = vadd.f32 %v34, 1.0
    %v39 = vadd.f32 %v31, %v33
    %v40 = vadd.f32 %v32, %v34
    %v41 = vsel %vm35, %v37, %v39
    %v42 = vsel %vm36, %v38, %v40
    %v43 = vmul.f32 %v31, 2.0
    %v44 = vmul.f32 %v32, 2.0
    %v45 = vsel %vm35, %v43, 2.0
    %v46 = vsel %vm36, %v44, 2.0
    %v47 = vadd.f32 %v41, %v45
    %v48 = vadd.f32 %v42, %v46
    %v49 = vrcp.pop %v47
    %v50 = vmul.f32 %v41, %v49
    %v51 = vrcp.pop %v48
    %v52 = vmul.f32 %v42, %v51
    %v53 = vmul.f32 %v21, %v50
    %v54 = vmul.f32 %v22, %v52
    %55 = vst [vmem:[#allocation5] sm:$0xff] %v53
    %56 = vst [vmem:[#allocation5 + $0x8] sm:$0xff] %v54
    // Predicated region
    $region10: #{tpu_custom_call.1} parent=1 // pred_check
      _
    $region11: #{tpu_custom_call.1} parent=1 // pred_check_branch
      %58 = sbr.rel (0) target = $region13
    $region12: #{tpu_custom_call.1} parent=1 // pred_region
      %s60 = ssub.s32 256, 256
      %61 = vsyncadd [#allocation4], %s60
      %s63 = sshll.u32 [#allocation5], 4
      %s64 = int_to_ptr.vmem [resolvable:$true] %s63
      %66 = dma.vmem_to_hbm [thread:$0]  %s64, 256, %s1, [#allocation4]
    $region13: #{tpu_custom_call.1} parent=1 // pred_fallthru
      _
    // Predicated region
    $region14: #{tpu_custom_call.1} parent=1 // pred_check
      _
    $region15: #{tpu_custom_call.1} parent=1 // pred_check_branch
      %68 = sbr.rel (0) target = $region17
    $region16: #{tpu_custom_call.1} parent=1 // pred_region
      %69 = dma.done [#allocation4], 256
    $region17: #{tpu_custom_call.1} parent=1 // pred_fallthru
      _
    %70 = vsyncpa [#allocation3], 1
    %71 = vsyncpa [#allocation4], 1

</llo_original>
